<compile_context>
chip_gen: v6e
topology: v6e:2x2x1
jax: 0.10.0
libtpu: 0.0.40
codegen_flags: <defaults>
</compile_context>

<pallas_src>
import jax
import jax.numpy as jnp
from jax import lax
from jax.experimental import pallas as pl
from jax.experimental.pallas import tpu as pltpu

EPS = 1e-5
_STEP_OVERHEAD_ROWS = 16      # ~0.35us grid-step overhead expressed in row-equivalents


def _round_up(x, m):
    return (x + m - 1) // m * m


def _pipeline_mode_supported():
    try:
        pl.BlockSpec((8, 128), lambda i: (0, 0), pipeline_mode=pl.Buffered(1))
        return True
    except Exception:
        return False


_PIPELINE_MODE_OK = _pipeline_mode_supported()


def _spec(shape, index_map, buffers=None):
    """BlockSpec with an optional explicit buffer count (graceful fallback)."""
    if buffers is not None and _PIPELINE_MODE_OK:
        return pl.BlockSpec(shape, index_map, pipeline_mode=pl.Buffered(buffers))
    return pl.BlockSpec(shape, index_map)


def _vmem_budget_and_limit():
    """Generation-aware (tile-selection budget, scoped vmem limit) in bytes."""
    try:
        cap = int(pltpu.get_tpu_info().vmem_capacity_bytes)
    except Exception:
        cap = 64 * 1024 * 1024                       # conservative (v7x-sized)
    if cap >= 100 * 1024 * 1024:                     # v5e / v6e: 128 MiB parts
        return 96 * 1024 * 1024, 110 * 1024 * 1024
    return 40 * 1024 * 1024, 48 * 1024 * 1024        # v7x: 64 MiB per TC


def _pick_seq_tile(S, B, F_pad, D_pad, in_bytes, out_bytes, budget,
                   n_in_buf, n_const_buf):
    """Pick a sequence row tile: large for MXU/DMA efficiency, minimal sequence
    padding, fits the VMEM budget, and keeps the parallel grid extent >= 2."""
    s_pad8 = _round_up(max(S, 1), 8)
    const_bytes = n_const_buf * (
        in_bytes * (F_pad * D_pad + 2 * D_pad * D_pad)     # weight matrices
        + 8 * 4 * 8 * D_pad)                               # f32 [1,D] vectors (sublane pad)
    candidates = [c for c in (512, 256, 128, 64, 32, 16, 8) if c <= s_pad8] or [8]
    best = None
    for ts in candidates:
        act_bytes = (n_in_buf * ts * F_pad * in_bytes      # input pipeline buffers
                     + 2 * ts * D_pad * out_bytes          # output pipeline buffers
                     + 6 * 4 * ts * D_pad)                 # f32 body temporaries
        if const_bytes + act_bytes > budget and ts > 8:
            continue
        s_total = _round_up(s_pad8, ts)
        score = s_total + (s_total // ts) * _STEP_OVERHEAD_ROWS
        if best is None or score < best[0]:
            best = (score, ts, s_total)
    _, ts, s_total = best
    # v7x has 2 TensorCores per chip: make sure both get work.
    while B * (s_total // ts) < 2 and ts > 8:
        ts //= 2
        s_total = _round_up(s_pad8, ts)
    return ts, s_total


def _make_fusion_kernel(d_true, d_pad):
    need_mask = d_pad != d_true

    def kernel(
        sp_ref,                 # [ts, F_pad] compute_dtype  spatial rows
        stc_ref,                # [1, D_pad]  f32            per-batch stmap contribution
        wsp_ref, bsp_ref,       # [F_pad, D_pad], [1, D_pad]  spatial_proj
        gsp_ref, bln_ref,       # [1, D_pad] x2               spatial_norm (att folded in)
        w1a_ref,                # [D_pad, D_pad]              spatial half of fusion Linear
        w2_ref, b2_ref,         # [D_pad, D_pad], [1, D_pad]  fusion Linear #2
        gf_ref, bf_ref,         # [1, D_pad] x2               fusion_norm
        out_ref,                # [ts, D_pad] compute_dtype
    ):
        if need_mask:
            lane = lax.broadcasted_iota(jnp.int32, (1, d_pad), 1)
            dmask = (lane < d_true).astype(jnp.float32)
        else:
            dmask = None

        def layernorm(x, gamma, beta):
            if dmask is None:
                mean = jnp.mean(x, axis=-1, keepdims=True)
                cen = x - mean
                var = jnp.mean(cen * cen, axis=-1, keepdims=True)
            else:
                # Padded feature columns are exactly zero, so moments over the
                # true width match the unpadded LayerNorm exactly.
                inv_d = jnp.float32(1.0 / d_true)
                mean = jnp.sum(x, axis=-1, keepdims=True) * inv_d
                cen = (x - mean) * dmask
                var = jnp.sum(cen * cen, axis=-1, keepdims=True) * inv_d
            return (x - mean) * lax.rsqrt(var + EPS) * gamma + beta

        # spatial projection (MXU, f32 accumulation)
        spatial_proj = (
            jnp.dot(sp_ref[...], wsp_ref[...], preferred_element_type=jnp.float32)
            + bsp_ref[...])

        # spatial LayerNorm with the attention scalar pre-folded into gamma/beta
        spatial_w = layernorm(spatial_proj, gsp_ref[...], bln_ref[...])

        # Stash the residual now so the f32 spatial_proj temp doesn't stay live.
        out_ref[...] = spatial_proj.astype(out_ref.dtype)

        # fusion Linear(2D -> D) on concat == spatial half in-kernel + per-batch
        # stmap contribution (stmap_w @ W1b + b1), precomputed in the wrapper.
        h = (jnp.dot(spatial_w.astype(w1a_ref.dtype), w1a_ref[...],
                     preferred_element_type=jnp.float32)
             + stc_ref[...])
        h = h * jax.nn.sigmoid(h)          # SiLU (dropout = identity in eval mode)

        fused = (jnp.dot(h.astype(w2_ref.dtype), w2_ref[...],
                         preferred_element_type=jnp.float32)
                 + b2_ref[...])
        fused = layernorm(fused, gf_ref[...], bf_ref[...])

        # dropout = identity; residual with spatial_proj stored above
        out_ref[...] = (out_ref[...].astype(jnp.float32) + fused).astype(out_ref.dtype)

    return kernel


def multimodal_fusion_block(spatial_features, stmap_features, params,
                            *, compute_dtype=jnp.bfloat16):
    """spatial_features: [B, S, F] or [B, F]; stmap_features: [B, F]."""
    assert stmap_features.ndim == 2, "stmap_features must be [batch, feature_dim]"
    squeeze_seq = False
    if spatial_features.ndim == 2:
        spatial_features = spatial_features[:, None, :]
        squeeze_seq = True
    B, S, F = spatial_features.shape
    D = params["wsp"].shape[1]

    att_sp = params["att"][0, 0]
    att_st = params["att"][0, 1]

    # ---- tiny per-batch precompute (pure JAX, f32): whole stmap branch ----
    stmap_proj = stmap_features.astype(jnp.float32) @ params["wst"] + params["bst"]
    mean = stmap_proj.mean(-1, keepdims=True)
    var = ((stmap_proj - mean) ** 2).mean(-1, keepdims=True)
    stmap_w = ((stmap_proj - mean) * lax.rsqrt(var + EPS) * params["g_st"]
               + params["b_st"]) * att_st
    st_contrib = (stmap_w @ params["w1b"] + params["b1"])[:, None, :]   # [B,1,D] f32
    st_contrib = st_contrib.astype(jnp.float32)

    # fold the spatial attention scalar into the spatial LayerNorm affine params
    g_sp_eff = (params["g_sp"] * att_sp).astype(jnp.float32)
    b_sp_eff = (params["b_sp"] * att_sp).astype(jnp.float32)

    # ---- lane-dense padding of the feature dims (zero-pad; masked LN in-kernel
    # keeps semantics; padded columns stay exactly zero through the whole body)
    F_pad = _round_up(F, 128)
    D_pad = _round_up(D, 128)

    def pad_last(x, tgt):
        if x.shape[-1] == tgt:
            return x
        return jnp.pad(x, [(0, 0)] * (x.ndim - 1) + [(0, tgt - x.shape[-1])])

    def pad2(x, r_tgt, c_tgt):
        pr, pc = r_tgt - x.shape[0], c_tgt - x.shape[1]
        if pr == 0 and pc == 0:
            return x
        return jnp.pad(x, ((0, pr), (0, pc)))

    in_bytes = jnp.dtype(compute_dtype).itemsize
    out_bytes = in_bytes
    budget, vmem_limit = _vmem_budget_and_limit()
    big_vmem = budget > 64 * 1024 * 1024
    n_const_buf = 1 if _PIPELINE_MODE_OK else 2
    in_buffers = 3 if (big_vmem and _PIPELINE_MODE_OK) else None
    n_in_buf = in_buffers if in_buffers is not None else 2

    ts, S_pad = _pick_seq_tile(S, B, F_pad, D_pad, in_bytes, out_bytes,
                               budget, n_in_buf, n_const_buf)
    n_tiles = S_pad // ts

    sp = spatial_features.astype(compute_dtype)
    if S_pad != S or F_pad != F:
        sp = jnp.pad(sp, ((0, 0), (0, S_pad - S), (0, F_pad - F)))

    wsp = pad2(params["wsp"], F_pad, D_pad).astype(compute_dtype)
    w1a = pad2(params["w1a"], D_pad, D_pad).astype(compute_dtype)
    w2 = pad2(params["w2"], D_pad, D_pad).astype(compute_dtype)
    bsp = pad_last(params["bsp"], D_pad).astype(jnp.float32)
    b2 = pad_last(params["b2"], D_pad).astype(jnp.float32)
    g_f = pad_last(params["g_f"], D_pad).astype(jnp.float32)
    b_f = pad_last(params["b_f"], D_pad).astype(jnp.float32)
    g_sp_eff = pad_last(g_sp_eff, D_pad)
    b_sp_eff = pad_last(b_sp_eff, D_pad)
    st_contrib = pad_last(st_contrib, D_pad)

    kernel = _make_fusion_kernel(D, D_pad)

    def const_spec(shape):
        # grid-invariant operands: DMA'd once, single-buffered when supported
        return _spec(shape, lambda b, si: tuple(0 for _ in shape), buffers=1)

    flops = 2 * B * S_pad * (F_pad * D_pad + 2 * D_pad * D_pad)
    bytes_accessed = (B * S_pad * F_pad * in_bytes            # spatial rows in
                      + B * S_pad * D_pad * out_bytes         # output
                      + in_bytes * (F_pad * D_pad + 2 * D_pad * D_pad)   # weights
                      + (B + 8) * D_pad * 4)                  # stc + vectors
    cost = pl.CostEstimate(flops=int(flops),
                           transcendentals=int(B * S_pad * D_pad),
                           bytes_accessed=int(bytes_accessed))

    out = pl.pallas_call(
        kernel,
        out_shape=jax.ShapeDtypeStruct((B, S_pad, D_pad), compute_dtype),
        grid_spec=pltpu.PrefetchScalarGridSpec(
            num_scalar_prefetch=0,
            grid=(B, n_tiles),
            in_specs=[
                _spec((None, ts, F_pad), lambda b, si: (b, si, 0),
                      buffers=in_buffers),                         # spatial rows
                _spec((None, 1, D_pad), lambda b, si: (b, 0, 0)),  # stmap contrib
                const_spec((F_pad, D_pad)),   # wsp
                const_spec((1, D_pad)),       # bsp
                const_spec((1, D_pad)),       # g_sp * att_sp
                const_spec((1, D_pad)),       # b_sp * att_sp
                const_spec((D_pad, D_pad)),   # w1a
                const_spec((D_pad, D_pad)),   # w2
                const_spec((1, D_pad)),       # b2
                const_spec((1, D_pad)),       # g_f
                const_spec((1, D_pad)),       # b_f
            ],
            out_specs=pl.BlockSpec((None, ts, D_pad), lambda b, si: (b, si, 0)),
        ),
        compiler_params=pltpu.CompilerParams(
            dimension_semantics=("parallel", "parallel"),
            vmem_limit_bytes=vmem_limit,
        ),
        cost_estimate=cost,
    )(sp, st_contrib, wsp, bsp, g_sp_eff, b_sp_eff, w1a, w2, b2, g_f, b_f)

    out = out[:, :S, :D]
    if squeeze_seq:
        out = out[:, 0, :]
    return out


def init_params(key, feature_dim, fusion_dim):
    ks = jax.random.split(key, 6)
    scale = 0.02
    F, D = feature_dim, fusion_dim
    return {
        "wsp": scale * jax.random.normal(ks[0], (F, D), jnp.float32),
        "bsp": jnp.zeros((1, D), jnp.float32),
        "wst": scale * jax.random.normal(ks[1], (F, D), jnp.float32),
        "bst": jnp.zeros((1, D), jnp.float32),
        "g_sp": jnp.ones((1, D), jnp.float32),
        "b_sp": jnp.zeros((1, D), jnp.float32),
        "g_st": jnp.ones((1, D), jnp.float32),
        "b_st": jnp.zeros((1, D), jnp.float32),
        "g_f": jnp.ones((1, D), jnp.float32),
        "b_f": jnp.zeros((1, D), jnp.float32),
        "att": jnp.ones((1, 2), jnp.float32),   # (spatial_attention, stmap_attention)
        "w1a": scale * jax.random.normal(ks[2], (D, D), jnp.float32),
        "w1b": scale * jax.random.normal(ks[3], (D, D), jnp.float32),
        "b1": jnp.zeros((1, D), jnp.float32),
        "w2": scale * jax.random.normal(ks[4], (D, D), jnp.float32),
        "b2": jnp.zeros((1, D), jnp.float32),
    }


def reference_forward(spatial, stmap, p):
    """Pure-JAX f32 reference mirroring the PyTorch module (eval mode)."""
    B, S, F = spatial.shape
    stmap = jnp.broadcast_to(stmap[:, None, :], (B, S, F))

    def ln(x, g, b):
        mean = x.mean(-1, keepdims=True)
        var = ((x - mean) ** 2).mean(-1, keepdims=True)
        return (x - mean) / jnp.sqrt(var + EPS) * g + b

    spatial_proj = spatial @ p["wsp"] + p["bsp"]
    stmap_proj = stmap @ p["wst"] + p["bst"]
    sw = ln(spatial_proj, p["g_sp"], p["b_sp"]) * p["att"][0, 0]
    tw = ln(stmap_proj, p["g_st"], p["b_st"]) * p["att"][0, 1]
    h = sw @ p["w1a"] + tw @ p["w1b"] + p["b1"]
    h = h * jax.nn.sigmoid(h)
    fused = h @ p["w2"] + p["b2"]
    fused = ln(fused, p["g_f"], p["b_f"])
    return fused + spatial_proj


if __name__ == "__main__":
    B, S, F, D = 2, 8, 32, 32
    key = jax.random.PRNGKey(0)
    k_sp, k_st, k_par = jax.random.split(key, 3)

    spatial_features = jax.random.normal(k_sp, (B, S, F), jnp.float32)
    stmap_features = jax.random.normal(k_st, (B, F), jnp.float32)
    params = init_params(k_par, F, D)

    ref = reference_forward(spatial_features, stmap_features, params)

    # fast path: bf16 residency and bf16 output (default)
    out = multimodal_fusion_block(spatial_features, stmap_features, params)
    out = jax.block_until_ready(out)
    assert out.shape == (B, S, D)
    assert out.dtype == jnp.bfloat16
    out32 = out.astype(jnp.float32)
    assert jnp.allclose(out32, ref, atol=5e-2, rtol=5e-2), (
        f"bf16 path mismatch, max abs err {jnp.max(jnp.abs(out32 - ref))}")

    # f32 path for a tight numerical check of the kernel structure
    out_f32 = multimodal_fusion_block(
        spatial_features, stmap_features, params, compute_dtype=jnp.float32)
    out_f32 = jax.block_until_ready(out_f32)
    assert jnp.allclose(out_f32, ref, atol=1e-4, rtol=1e-4), (
        f"f32 path mismatch, max abs err {jnp.max(jnp.abs(out_f32 - ref))}")

    print("KERNEL_OK")
</pallas_src>

<mosaic_0001>
module attributes {stable_mosaic.version = 11 : i64} {
  func.func @kernel(%arg0: i32, %arg1: i32, %arg2: memref<1x8x128xbf16, #tpu.memory_space<vmem>>, %arg3: memref<1x1x128xf32, #tpu.memory_space<vmem>>, %arg4: memref<128x128xbf16, #tpu.memory_space<vmem>>, %arg5: memref<1x128xf32, #tpu.memory_space<vmem>>, %arg6: memref<1x128xf32, #tpu.memory_space<vmem>>, %arg7: memref<1x128xf32, #tpu.memory_space<vmem>>, %arg8: memref<128x128xbf16, #tpu.memory_space<vmem>>, %arg9: memref<128x128xbf16, #tpu.memory_space<vmem>>, %arg10: memref<1x128xf32, #tpu.memory_space<vmem>>, %arg11: memref<1x128xf32, #tpu.memory_space<vmem>>, %arg12: memref<1x128xf32, #tpu.memory_space<vmem>>, %arg13: memref<1x8x128xbf16, #tpu.memory_space<vmem>>) attributes {dimension_semantics = [#tpu.dimension_semantics<parallel>, #tpu.dimension_semantics<parallel>], iteration_bounds = array<i64: 2, 1>, scalar_prefetch = 0 : i64, scratch_operands = 0 : i64, tpu.core_type = #tpu.core_type<tc>, window_params = [{transform_indices = @transform_0, window_bounds = array<i64: 1, 8, 128>}, {transform_indices = @transform_1, window_bounds = array<i64: 1, 1, 128>}, {pipeline_mode = #tpu.pipeline_mode<synchronous>, transform_indices = @transform_2, window_bounds = array<i64: 128, 128>}, {pipeline_mode = #tpu.pipeline_mode<synchronous>, transform_indices = @transform_3, window_bounds = array<i64: 1, 128>}, {pipeline_mode = #tpu.pipeline_mode<synchronous>, transform_indices = @transform_4, window_bounds = array<i64: 1, 128>}, {pipeline_mode = #tpu.pipeline_mode<synchronous>, transform_indices = @transform_5, window_bounds = array<i64: 1, 128>}, {pipeline_mode = #tpu.pipeline_mode<synchronous>, transform_indices = @transform_6, window_bounds = array<i64: 128, 128>}, {pipeline_mode = #tpu.pipeline_mode<synchronous>, transform_indices = @transform_7, window_bounds = array<i64: 128, 128>}, {pipeline_mode = #tpu.pipeline_mode<synchronous>, transform_indices = @transform_8, window_bounds = array<i64: 1, 128>}, {pipeline_mode = #tpu.pipeline_mode<synchronous>, transform_indices = @transform_9, window_bounds = array<i64: 1, 128>}, {pipeline_mode = #tpu.pipeline_mode<synchronous>, transform_indices = @transform_10, window_bounds = array<i64: 1, 128>}, {transform_indices = @transform_11, window_bounds = array<i64: 1, 8, 128>}]} {
    %0 = tpu.iota {dimensions = array<i32: 1>} : vector<1x128xi32>
    %c32_i32 = arith.constant 32 : i32
    %1 = vector.broadcast %c32_i32 : i32 to vector<1x128xi32>
    %2 = arith.cmpi slt, %0, %1 : vector<1x128xi32>
    %3 = arith.extui %2 : vector<1x128xi1> to vector<1x128xi32>
    %4 = arith.sitofp %3 : vector<1x128xi32> to vector<1x128xf32>
    %c0 = arith.constant 0 : index
    %c0_0 = arith.constant 0 : index
    %c0_1 = arith.constant 0 : index
    %5 = vector.load %arg2[%c0, %c0_0, %c0_1] : memref<1x8x128xbf16, #tpu.memory_space<vmem>>, vector<1x8x128xbf16>
    %6 = vector.shape_cast %5 : vector<1x8x128xbf16> to vector<8x128xbf16>
    %c0_2 = arith.constant 0 : index
    %c0_3 = arith.constant 0 : index
    %7 = vector.load %arg4[%c0_2, %c0_3] : memref<128x128xbf16, #tpu.memory_space<vmem>>, vector<128x128xbf16>
    %cst = arith.constant dense<0.000000e+00> : vector<8x128xf32>
    %8 = tpu.matmul %6, %7, %cst {dimension_numbers = #tpu.dot_dimension_numbers<[1], [0], [0], [1], [0, 0, 1, 1], [], []>} : vector<8x128xbf16>, vector<128x128xbf16>, vector<8x128xf32> -> vector<8x128xf32>
    %c0_4 = arith.constant 0 : index
    %c0_5 = arith.constant 0 : index
    %9 = vector.load %arg5[%c0_4, %c0_5] : memref<1x128xf32, #tpu.memory_space<vmem>>, vector<1x128xf32>
    %10 = vector.broadcast %9 : vector<1x128xf32> to vector<8x128xf32>
    %11 = arith.addf %8, %10 : vector<8x128xf32>
    %c0_6 = arith.constant 0 : index
    %c0_7 = arith.constant 0 : index
    %12 = vector.load %arg6[%c0_6, %c0_7] : memref<1x128xf32, #tpu.memory_space<vmem>>, vector<1x128xf32>
    %c0_8 = arith.constant 0 : index
    %c0_9 = arith.constant 0 : index
    %13 = vector.load %arg7[%c0_8, %c0_9] : memref<1x128xf32, #tpu.memory_space<vmem>>, vector<1x128xf32>
    %cst_10 = arith.constant dense<0.000000e+00> : vector<8xf32>
    %14 = vector.multi_reduction <add>, %11, %cst_10 [1] : vector<8x128xf32> to vector<8xf32>
    %15 = vector.shape_cast %14 : vector<8xf32> to vector<8x1xf32>
    %cst_11 = arith.constant 3.125000e-02 : f32
    %16 = vector.broadcast %cst_11 : f32 to vector<8x1xf32>
    %17 = arith.mulf %15, %16 : vector<8x1xf32>
    %18 = vector.broadcast %17 : vector<8x1xf32> to vector<8x128xf32>
    %19 = arith.subf %11, %18 : vector<8x128xf32>
    %20 = vector.broadcast %4 : vector<1x128xf32> to vector<8x128xf32>
    %21 = arith.mulf %19, %20 : vector<8x128xf32>
    %22 = arith.mulf %21, %21 : vector<8x128xf32>
    %cst_12 = arith.constant dense<0.000000e+00> : vector<8xf32>
    %23 = vector.multi_reduction <add>, %22, %cst_12 [1] : vector<8x128xf32> to vector<8xf32>
    %24 = vector.shape_cast %23 : vector<8xf32> to vector<8x1xf32>
    %cst_13 = arith.constant 3.125000e-02 : f32
    %25 = vector.broadcast %cst_13 : f32 to vector<8x1xf32>
    %26 = arith.mulf %24, %25 : vector<8x1xf32>
    %27 = vector.broadcast %17 : vector<8x1xf32> to vector<8x128xf32>
    %28 = arith.subf %11, %27 : vector<8x128xf32>
    %cst_14 = arith.constant 9.99999974E-6 : f32
    %29 = vector.broadcast %cst_14 : f32 to vector<8x1xf32>
    %30 = arith.addf %26, %29 : vector<8x1xf32>
    %31 = math.rsqrt %30 : vector<8x1xf32>
    %32 = vector.broadcast %31 : vector<8x1xf32> to vector<8x128xf32>
    %33 = arith.mulf %28, %32 : vector<8x128xf32>
    %34 = vector.broadcast %12 : vector<1x128xf32> to vector<8x128xf32>
    %35 = arith.mulf %33, %34 : vector<8x128xf32>
    %36 = vector.broadcast %13 : vector<1x128xf32> to vector<8x128xf32>
    %37 = arith.addf %35, %36 : vector<8x128xf32>
    %38 = arith.truncf %11 : vector<8x128xf32> to vector<8x128xbf16>
    %c0_15 = arith.constant 0 : index
    %c0_16 = arith.constant 0 : index
    %c0_17 = arith.constant 0 : index
    %39 = vector.load %arg13[%c0_15, %c0_16, %c0_17] : memref<1x8x128xbf16, #tpu.memory_space<vmem>>, vector<1x8x128xbf16>
    %40 = vector.shape_cast %39 : vector<1x8x128xbf16> to vector<8x128xbf16>
    %41 = vector.shape_cast %38 : vector<8x128xbf16> to vector<1x8x128xbf16>
    tpu.vector_store %arg13[%c0_15, %c0_16, %c0_17], %41 {strides = array<i32>} : memref<1x8x128xbf16, #tpu.memory_space<vmem>>, vector<1x8x128xbf16>,
    %42 = arith.truncf %37 : vector<8x128xf32> to vector<8x128xbf16>
    %c0_18 = arith.constant 0 : index
    %c0_19 = arith.constant 0 : index
    %43 = vector.load %arg8[%c0_18, %c0_19] : memref<128x128xbf16, #tpu.memory_space<vmem>>, vector<128x128xbf16>
    %cst_20 = arith.constant dense<0.000000e+00> : vector<8x128xf32>
    %44 = tpu.matmul %42, %43, %cst_20 {dimension_numbers = #tpu.dot_dimension_numbers<[1], [0], [0], [1], [0, 0, 1, 1], [], []>} : vector<8x128xbf16>, vector<128x128xbf16>, vector<8x128xf32> -> vector<8x128xf32>
    %c0_21 = arith.constant 0 : index
    %c0_22 = arith.constant 0 : index
    %c0_23 = arith.constant 0 : index
    %45 = vector.load %arg3[%c0_21, %c0_22, %c0_23] : memref<1x1x128xf32, #tpu.memory_space<vmem>>, vector<1x1x128xf32>
    %46 = vector.shape_cast %45 : vector<1x1x128xf32> to vector<1x128xf32>
    %47 = vector.broadcast %46 : vector<1x128xf32> to vector<8x128xf32>
    %48 = arith.addf %44, %47 : vector<8x128xf32>
    %49 = arith.negf %48 : vector<8x128xf32>
    %50 = math.exp %49 : vector<8x128xf32>
    %cst_24 = arith.constant 1.000000e+00 : f32
    %51 = vector.broadcast %cst_24 : f32 to vector<8x128xf32>
    %52 = arith.addf %51, %50 : vector<8x128xf32>
    %53 = arith.divf %51, %52 : vector<8x128xf32>
    %54 = arith.mulf %48, %53 : vector<8x128xf32>
    %55 = arith.truncf %54 : vector<8x128xf32> to vector<8x128xbf16>
    %c0_25 = arith.constant 0 : index
    %c0_26 = arith.constant 0 : index
    %56 = vector.load %arg9[%c0_25, %c0_26] : memref<128x128xbf16, #tpu.memory_space<vmem>>, vector<128x128xbf16>
    %cst_27 = arith.constant dense<0.000000e+00> : vector<8x128xf32>
    %57 = tpu.matmul %55, %56, %cst_27 {dimension_numbers = #tpu.dot_dimension_numbers<[1], [0], [0], [1], [0, 0, 1, 1], [], []>} : vector<8x128xbf16>, vector<128x128xbf16>, vector<8x128xf32> -> vector<8x128xf32>
    %c0_28 = arith.constant 0 : index
    %c0_29 = arith.constant 0 : index
    %58 = vector.load %arg10[%c0_28, %c0_29] : memref<1x128xf32, #tpu.memory_space<vmem>>, vector<1x128xf32>
    %59 = vector.broadcast %58 : vector<1x128xf32> to vector<8x128xf32>
    %60 = arith.addf %57, %59 : vector<8x128xf32>
    %c0_30 = arith.constant 0 : index
    %c0_31 = arith.constant 0 : index
    %61 = vector.load %arg11[%c0_30, %c0_31] : memref<1x128xf32, #tpu.memory_space<vmem>>, vector<1x128xf32>
    %c0_32 = arith.constant 0 : index
    %c0_33 = arith.constant 0 : index
    %62 = vector.load %arg12[%c0_32, %c0_33] : memref<1x128xf32, #tpu.memory_space<vmem>>, vector<1x128xf32>
    %cst_34 = arith.constant dense<0.000000e+00> : vector<8xf32>
    %63 = vector.multi_reduction <add>, %60, %cst_34 [1] : vector<8x128xf32> to vector<8xf32>
    %64 = vector.shape_cast %63 : vector<8xf32> to vector<8x1xf32>
    %cst_35 = arith.constant 3.125000e-02 : f32
    %65 = vector.broadcast %cst_35 : f32 to vector<8x1xf32>
    %66 = arith.mulf %64, %65 : vector<8x1xf32>
    %67 = vector.broadcast %66 : vector<8x1xf32> to vector<8x128xf32>
    %68 = arith.subf %60, %67 : vector<8x128xf32>
    %69 = vector.broadcast %4 : vector<1x128xf32> to vector<8x128xf32>
    %70 = arith.mulf %68, %69 : vector<8x128xf32>
    %71 = arith.mulf %70, %70 : vector<8x128xf32>
    %cst_36 = arith.constant dense<0.000000e+00> : vector<8xf32>
    %72 = vector.multi_reduction <add>, %71, %cst_36 [1] : vector<8x128xf32> to vector<8xf32>
    %73 = vector.shape_cast %72 : vector<8xf32> to vector<8x1xf32>
    %cst_37 = arith.constant 3.125000e-02 : f32
    %74 = vector.broadcast %cst_37 : f32 to vector<8x1xf32>
    %75 = arith.mulf %73, %74 : vector<8x1xf32>
    %76 = vector.broadcast %66 : vector<8x1xf32> to vector<8x128xf32>
    %77 = arith.subf %60, %76 : vector<8x128xf32>
    %cst_38 = arith.constant 9.99999974E-6 : f32
    %78 = vector.broadcast %cst_38 : f32 to vector<8x1xf32>
    %79 = arith.addf %75, %78 : vector<8x1xf32>
    %80 = math.rsqrt %79 : vector<8x1xf32>
    %81 = vector.broadcast %80 : vector<8x1xf32> to vector<8x128xf32>
    %82 = arith.mulf %77, %81 : vector<8x128xf32>
    %83 = vector.broadcast %61 : vector<1x128xf32> to vector<8x128xf32>
    %84 = arith.mulf %82, %83 : vector<8x128xf32>
    %85 = vector.broadcast %62 : vector<1x128xf32> to vector<8x128xf32>
    %86 = arith.addf %84, %85 : vector<8x128xf32>
    %c0_39 = arith.constant 0 : index
    %c0_40 = arith.constant 0 : index
    %c0_41 = arith.constant 0 : index
    %87 = vector.load %arg13[%c0_39, %c0_40, %c0_41] : memref<1x8x128xbf16, #tpu.memory_space<vmem>>, vector<1x8x128xbf16>
    %88 = vector.shape_cast %87 : vector<1x8x128xbf16> to vector<8x128xbf16>
    %89 = arith.extf %88 : vector<8x128xbf16> to vector<8x128xf32>
    %90 = arith.addf %89, %86 : vector<8x128xf32>
    %91 = arith.truncf %90 : vector<8x128xf32> to vector<8x128xbf16>
    %c0_42 = arith.constant 0 : index
    %c0_43 = arith.constant 0 : index
    %c0_44 = arith.constant 0 : index
    %92 = vector.load %arg13[%c0_42, %c0_43, %c0_44] : memref<1x8x128xbf16, #tpu.memory_space<vmem>>, vector<1x8x128xbf16>
    %93 = vector.shape_cast %92 : vector<1x8x128xbf16> to vector<8x128xbf16>
    %94 = vector.shape_cast %91 : vector<8x128xbf16> to vector<1x8x128xbf16>
    tpu.vector_store %arg13[%c0_42, %c0_43, %c0_44], %94 {strides = array<i32>} : memref<1x8x128xbf16, #tpu.memory_space<vmem>>, vector<1x8x128xbf16>,
    return
  }
  func.func @transform_0(%arg0: i32, %arg1: i32) -> (i32, i32, i32) {
    %c0_i32 = arith.constant 0 : i32
    %c0_i32_0 = arith.constant 0 : i32
    return %arg0, %arg1, %c0_i32 : i32, i32, i32
  }
  func.func @transform_1(%arg0: i32, %arg1: i32) -> (i32, i32, i32) {
    %c0_i32 = arith.constant 0 : i32
    %c0_i32_0 = arith.constant 0 : i32
    %c0_i32_1 = arith.constant 0 : i32
    return %arg0, %c0_i32, %c0_i32_0 : i32, i32, i32
  }
  func.func @transform_2(%arg0: i32, %arg1: i32) -> (i32, i32) {
    %c0_i32 = arith.constant 0 : i32
    %c0_i32_0 = arith.constant 0 : i32
    %c0_i32_1 = arith.constant 0 : i32
    return %c0_i32, %c0_i32_0 : i32, i32
  }
  func.func @transform_3(%arg0: i32, %arg1: i32) -> (i32, i32) {
    %c0_i32 = arith.constant 0 : i32
    %c0_i32_0 = arith.constant 0 : i32
    %c0_i32_1 = arith.constant 0 : i32
    return %c0_i32, %c0_i32_0 : i32, i32
  }
  func.func @transform_4(%arg0: i32, %arg1: i32) -> (i32, i32) {
    %c0_i32 = arith.constant 0 : i32
    %c0_i32_0 = arith.constant 0 : i32
    %c0_i32_1 = arith.constant 0 : i32
    return %c0_i32, %c0_i32_0 : i32, i32
  }
  func.func @transform_5(%arg0: i32, %arg1: i32) -> (i32, i32) {
    %c0_i32 = arith.constant 0 : i32
    %c0_i32_0 = arith.constant 0 : i32
    %c0_i32_1 = arith.constant 0 : i32
    return %c0_i32, %c0_i32_0 : i32, i32
  }
  func.func @transform_6(%arg0: i32, %arg1: i32) -> (i32, i32) {
    %c0_i32 = arith.constant 0 : i32
    %c0_i32_0 = arith.constant 0 : i32
    %c0_i32_1 = arith.constant 0 : i32
    return %c0_i32, %c0_i32_0 : i32, i32
  }
  func.func @transform_7(%arg0: i32, %arg1: i32) -> (i32, i32) {
    %c0_i32 = arith.constant 0 : i32
    %c0_i32_0 = arith.constant 0 : i32
    %c0_i32_1 = arith.constant 0 : i32
    return %c0_i32, %c0_i32_0 : i32, i32
  }
  func.func @transform_8(%arg0: i32, %arg1: i32) -> (i32, i32) {
    %c0_i32 = arith.constant 0 : i32
    %c0_i32_0 = arith.constant 0 : i32
    %c0_i32_1 = arith.constant 0 : i32
    return %c0_i32, %c0_i32_0 : i32, i32
  }
  func.func @transform_9(%arg0: i32, %arg1: i32) -> (i32, i32) {
    %c0_i32 = arith.constant 0 : i32
    %c0_i32_0 = arith.constant 0 : i32
    %c0_i32_1 = arith.constant 0 : i32
    return %c0_i32, %c0_i32_0 : i32, i32
  }
  func.func @transform_10(%arg0: i32, %arg1: i32) -> (i32, i32) {
    %c0_i32 = arith.constant 0 : i32
    %c0_i32_0 = arith.constant 0 : i32
    %c0_i32_1 = arith.constant 0 : i32
    return %c0_i32, %c0_i32_0 : i32, i32
  }
  func.func @transform_11(%arg0: i32, %arg1: i32) -> (i32, i32, i32) {
    %c0_i32 = arith.constant 0 : i32
    %c0_i32_0 = arith.constant 0 : i32
    return %arg0, %arg1, %c0_i32 : i32, i32, i32
  }
}

</mosaic_0001>

<llo_original>
// kernel: tpu_custom_call.1
$region0: #{tpu_custom_call.1}
  #allocation0 [shape = 'u32[]', space=smem, size = 0x4, offset = 0x4, fixed_abs, tag = 'smem constant byte address 0x4 - core index']
  #allocation1 [shape = 'u32[144,128]{1,0:T(1,128)}', space=vmem, size = 0x12000, scoped, tag = 'internal scratch']
  %s0 = inlined_call_operand.hbm [shape: bf16[2,8,128], index: 0, kind: input, shape index: {}]
  %s1 = inlined_call_operand.hbm [shape: f32[2,1,128], index: 1, kind: input, shape index: {}]
  %s2 = inlined_call_operand.hbm [shape: bf16[128,128], index: 2, kind: input, shape index: {}]
  %s3 = inlined_call_operand.vmem [shape: f32[1,128], index: 3, kind: input, shape index: {}]
  %s4 = inlined_call_operand.vmem [shape: f32[1,128], index: 4, kind: input, shape index: {}]
  %s5 = inlined_call_operand.vmem [shape: f32[1,128], index: 5, kind: input, shape index: {}]
  %s6 = inlined_call_operand.hbm [shape: bf16[128,128], index: 6, kind: input, shape index: {}]
  %s7 = inlined_call_operand.hbm [shape: bf16[128,128], index: 7, kind: input, shape index: {}]
  %s8 = inlined_call_operand.vmem [shape: f32[1,128], index: 8, kind: input, shape index: {}]
  %s9 = inlined_call_operand.vmem [shape: f32[1,128], index: 9, kind: input, shape index: {}]
  %s10 = inlined_call_operand.vmem [shape: f32[1,128], index: 10, kind: input, shape index: {}]
  %s11 = inlined_call_operand.hbm [shape: bf16[2,8,128], index: 11, kind: output, shape index: {}]
  %s12 = sld [smem:[#allocation0]]
  $region97: #{tpu_custom_call.1} parent=0
    _
  %s14 = ssub.s32 1, %s12
  %s15 = scalar_select 0, %s14, %s12
  $region1: #{tpu_custom_call.1} parent=0
    #allocation2 [shape = 'u8[4096]{0}', space=vmem, size = 0x1000, scoped, tag = 'input window, operand 0']
    #allocation3 [shape = 's32[2]{0}', space=sflag, size = 0x8, scoped, tag = 'scoped memory for tpu_custom_call.1']
    #allocation4 [shape = 's32[2]{0}', space=sflag, size = 0x8, scoped, tag = 'scoped memory for tpu_custom_call.1']
    #allocation5 [shape = 'u8[1024]{0}', space=vmem, size = 0x400, scoped, tag = 'input window, operand 1']
    #allocation6 [shape = 's32[2]{0}', space=sflag, size = 0x8, scoped, tag = 'scoped memory for tpu_custom_call.1']
    #allocation7 [shape = 'u8[32768]{0}', space=vmem, size = 0x8000, scoped, tag = 'input window, operand 2, single buffered']
    #allocation8 [shape = 'u8[32768]{0}', space=vmem, size = 0x8000, scoped, tag = 'input window, operand 6, single buffered']
    #allocation9 [shape = 's32[1]{0}', space=sflag, size = 0x4, scoped, tag = 'scoped memory for tpu_custom_call.1']
    #allocation10 [shape = 'u8[32768]{0}', space=vmem, size = 0x8000, scoped, tag = 'input window, operand 7, single buffered']
    #allocation11 [shape = 'u8[4096]{0}', space=vmem, size = 0x1000, scoped, tag = 'output window, operand 0']
    %16 = vsyncpa [#allocation3], 0
    %s17 = scalar_lea.sflag [#allocation3], 1
    %18 = vsyncpa %s17, 0
    %19 = vsyncpa [#allocation6], 0
    %s20 = scalar_lea.sflag [#allocation6], 1
    %21 = vsyncpa %s20, 0
    %22 = vsyncpa [#allocation9], 0
    %23 = vsyncpa [#allocation4], 0
    %s24 = scalar_lea.sflag [#allocation4], 1
    %25 = vsyncpa %s24, 0
    loop: start=0, step=1, limit=4
    $region2: #{tpu_custom_call.1} parent=1 // loop_pre_header
      _
    $region3: #{tpu_custom_call.1} parent=1 // loop_header
      %s27 = sphi 0, %s31
      %p28 = scmp.ge.s32.totalorder %s27, 4
      %s34 = sphi 0, %s46
      %s35 = sphi 0, %s42
      %s36 = sphi 0, %s34
      %s37 = sphi 0, %s35
      %s38 = sphi 0, %s36
      %s39 = sphi 0, %s37
      %s51 = sphi 0, %s53
      %s54 = sphi 0, %s51
      %s55 = sphi 0, %s54
      %s71 = sphi 0, %s55
      %s77 = sphi 0, %s79
      %s80 = sphi 0, %s77
      %s81 = sphi 0, %s80
      %s97 = sphi 0, %s81
      %s101 = sphi 0, %s101
      %s103 = sphi 0, %s101
      %s104 = sphi 0, %s103
      %s118 = sphi 0, %s104
      %s122 = sphi 0, %s122
      %s124 = sphi 0, %s122
      %s125 = sphi 0, %s124
      %s139 = sphi 0, %s125
      %s143 = sphi 0, %s143
      %s145 = sphi 0, %s143
      %s146 = sphi 0, %s145
      %s160 = sphi 0, %s146
      %s164 = sphi 0, %s164
      %s166 = sphi 0, %s164
      %s167 = sphi 0, %s166
      %s181 = sphi 0, %s167
      %s185 = sphi 0, %s185
      %s187 = sphi 0, %s185
      %s188 = sphi 0, %s187
      %s202 = sphi 0, %s188
      %s206 = sphi 0, %s206
      %s208 = sphi 0, %s206
      %s209 = sphi 0, %s208
      %s223 = sphi 0, %s209
      %s227 = sphi 0, %s227
      %s229 = sphi 0, %s227
      %s230 = sphi 0, %s229
      %s244 = sphi 0, %s230
      %s248 = sphi 0, %s248
      %s250 = sphi 0, %s248
      %s251 = sphi 0, %s250
      %s265 = sphi 0, %s251
      %s269 = sphi 0, %s269
      %s271 = sphi 0, %s269
      %s272 = sphi 0, %s271
      %s286 = sphi 0, %s272
      %s294 = sphi 0, %s296
      %s297 = sphi 0, %s294
      %s298 = sphi 0, %s297
      %s314 = sphi 0, %s298
    $region4: #{tpu_custom_call.1} parent=1 // loop_header_branch
      %30 = sbr.rel (%p28) target = $region8
    $region5: #{tpu_custom_call.1} parent=1 // loop_body
      %s32 = ssub.s32 %s27, 1
      %s33 = ssub.s32 %s27, 2
      %s40 = sadd.s32 1, %s35
      %p41 = scmp.ge.s32.totalorder %s40, 1
      %s42 = scalar_select %p41, 0, %s40
      %s43 = sadd.s32 1, %s34
      %s44 = scalar_select %p41, %s43, %s34
      %p45 = scmp.ge.s32.totalorder %s44, 2
      %s46 = scalar_select %p45, 0, %s44
      %s47 = ssub.s32 %s34, %s46
      %s48 = ssub.s32 %s35, %s42
      %s49 = sor.u32 %s47, %s48
      %p50 = scmp.eq.s32.totalorder %s49, 0
      %s52 = sadd.s32 %s51, 1
      %s53 = scalar_select %p50, %s51, %s52
      %p56 = pneg %p50
      %p57 = scmp.eq.s32.totalorder %s27, 1
      %p58 = por %p56, %p57
      %p59 = scmp.ne.s32.totalorder %s51, %s54
      %p60 = scmp.eq.s32.totalorder %s27, 0
      %p61 = por %p59, %p60
      %p62 = scmp.ne.s32.totalorder %s51, %s54
      %p63 = scmp.eq.s32.totalorder %s32, 1
      %p64 = por %p62, %p63
      %p65 = scmp.ne.s32.totalorder %s54, %s55
      %p66 = scmp.eq.s32.totalorder %s32, 0
      %p67 = por %p65, %p66
      %p68 = scmp.ne.s32.totalorder %s54, %s55
      %p69 = scmp.eq.s32.totalorder %s33, 1
      %p70 = por %p68, %p69
      %p72 = scmp.ne.s32.totalorder %s55, %s71
      %p73 = scmp.eq.s32.totalorder %s33, 0
      %p74 = por %p72, %p73
      %s75 = ssub.s32 %s34, %s46
      %p76 = scmp.eq.s32.totalorder %s75, 0
      %s78 = sadd.s32 %s77, 1
      %s79 = scalar_select %p76, %s77, %s78
      %p82 = pneg %p76
      %p83 = scmp.eq.s32.totalorder %s27, 1
      %p84 = por %p82, %p83
      %p85 = scmp.ne.s32.totalorder %s77, %s80
      %p86 = scmp.eq.s32.totalorder %s27, 0
      %p87 = por %p85, %p86
      %p88 = scmp.ne.s32.totalorder %s77, %s80
      %p89 = scmp.eq.s32.totalorder %s32, 1
      %p90 = por %p88, %p89
      %p91 = scmp.ne.s32.totalorder %s80, %s81
      %p92 = scmp.eq.s32.totalorder %s32, 0
      %p93 = por %p91, %p92
      %p94 = scmp.ne.s32.totalorder %s80, %s81
      %p95 = scmp.eq.s32.totalorder %s33, 1
      %p96 = por %p94, %p95
      %p98 = scmp.ne.s32.totalorder %s81, %s97
      %p99 = scmp.eq.s32.totalorder %s33, 0
      %p100 = por %p98, %p99
      %s102 = sadd.s32 %s101, 1
      %p105 = scmp.eq.s32.totalorder %s27, 1
      %p106 = scmp.ne.s32.totalorder %s101, %s103
      %p107 = scmp.eq.s32.totalorder %s27, 0
      %p108 = por %p106, %p107
      %p109 = scmp.ne.s32.totalorder %s101, %s103
      %p110 = scmp.eq.s32.totalorder %s32, 1
      %p111 = por %p109, %p110
      %p112 = scmp.ne.s32.totalorder %s103, %s104
      %p113 = scmp.eq.s32.totalorder %s32, 0
      %p114 = por %p112, %p113
      %p115 = scmp.ne.s32.totalorder %s103, %s104
      %p116 = scmp.eq.s32.totalorder %s33, 1
      %p117 = por %p115, %p116
      %p119 = scmp.ne.s32.totalorder %s104, %s118
      %p120 = scmp.eq.s32.totalorder %s33, 0
      %p121 = por %p119, %p120
      %s123 = sadd.s32 %s122, 1
      %p126 = scmp.eq.s32.totalorder %s27, 1
      %p127 = scmp.ne.s32.totalorder %s122, %s124
      %p128 = scmp.eq.s32.totalorder %s27, 0
      %p129 = por %p127, %p128
      %p130 = scmp.ne.s32.totalorder %s122, %s124
      %p131 = scmp.eq.s32.totalorder %s32, 1
      %p132 = por %p130, %p131
      %p133 = scmp.ne.s32.totalorder %s124, %s125
      %p134 = scmp.eq.s32.totalorder %s32, 0
      %p135 = por %p133, %p134
      %p136 = scmp.ne.s32.totalorder %s124, %s125
      %p137 = scmp.eq.s32.totalorder %s33, 1
      %p138 = por %p136, %p137
      %p140 = scmp.ne.s32.totalorder %s125, %s139
      %p141 = scmp.eq.s32.totalorder %s33, 0
      %p142 = por %p140, %p141
      %s144 = sadd.s32 %s143, 1
      %p147 = scmp.eq.s32.totalorder %s27, 1
      %p148 = scmp.ne.s32.totalorder %s143, %s145
      %p149 = scmp.eq.s32.totalorder %s27, 0
      %p150 = por %p148, %p149
      %p151 = scmp.ne.s32.totalorder %s143, %s145
      %p152 = scmp.eq.s32.totalorder %s32, 1
      %p153 = por %p151, %p152
      %p154 = scmp.ne.s32.totalorder %s145, %s146
      %p155 = scmp.eq.s32.totalorder %s32, 0
      %p156 = por %p154, %p155
      %p157 = scmp.ne.s32.totalorder %s145, %s146
      %p158 = scmp.eq.s32.totalorder %s33, 1
      %p159 = por %p157, %p158
      %p161 = scmp.ne.s32.totalorder %s146, %s160
      %p162 = scmp.eq.s32.totalorder %s33, 0
      %p163 = por %p161, %p162
      %s165 = sadd.s32 %s164, 1
      %p168 = scmp.eq.s32.totalorder %s27, 1
      %p169 = scmp.ne.s32.totalorder %s164, %s166
      %p170 = scmp.eq.s32.totalorder %s27, 0
      %p171 = por %p169, %p170
      %p172 = scmp.ne.s32.totalorder %s164, %s166
      %p173 = scmp.eq.s32.totalorder %s32, 1
      %p174 = por %p172, %p173
      %p175 = scmp.ne.s32.totalorder %s166, %s167
      %p176 = scmp.eq.s32.totalorder %s32, 0
      %p177 = por %p175, %p176
      %p178 = scmp.ne.s32.totalorder %s166, %s167
      %p179 = scmp.eq.s32.totalorder %s33, 1
      %p180 = por %p178, %p179
      %p182 = scmp.ne.s32.totalorder %s167, %s181
      %p183 = scmp.eq.s32.totalorder %s33, 0
      %p184 = por %p182, %p183
      %s186 = sadd.s32 %s185, 1
      %p189 = scmp.eq.s32.totalorder %s27, 1
      %p190 = scmp.ne.s32.totalorder %s185, %s187
      %p191 = scmp.eq.s32.totalorder %s27, 0
      %p192 = por %p190, %p191
      %p193 = scmp.ne.s32.totalorder %s185, %s187
      %p194 = scmp.eq.s32.totalorder %s32, 1
      %p195 = por %p193, %p194
      %p196 = scmp.ne.s32.totalorder %s187, %s188
      %p197 = scmp.eq.s32.totalorder %s32, 0
      %p198 = por %p196, %p197
      %p199 = scmp.ne.s32.totalorder %s187, %s188
      %p200 = scmp.eq.s32.totalorder %s33, 1
      %p201 = por %p199, %p200
      %p203 = scmp.ne.s32.totalorder %s188, %s202
      %p204 = scmp.eq.s32.totalorder %s33, 0
      %p205 = por %p203, %p204
      %s207 = sadd.s32 %s206, 1
      %p210 = scmp.eq.s32.totalorder %s27, 1
      %p211 = scmp.ne.s32.totalorder %s206, %s208
      %p212 = scmp.eq.s32.totalorder %s27, 0
      %p213 = por %p211, %p212
      %p214 = scmp.ne.s32.totalorder %s206, %s208
      %p215 = scmp.eq.s32.totalorder %s32, 1
      %p216 = por %p214, %p215
      %p217 = scmp.ne.s32.totalorder %s208, %s209
      %p218 = scmp.eq.s32.totalorder %s32, 0
      %p219 = por %p217, %p218
      %p220 = scmp.ne.s32.totalorder %s208, %s209
      %p221 = scmp.eq.s32.totalorder %s33, 1
      %p222 = por %p220, %p221
      %p224 = scmp.ne.s32.totalorder %s209, %s223
      %p225 = scmp.eq.s32.totalorder %s33, 0
      %p226 = por %p224, %p225
      %s228 = sadd.s32 %s227, 1
      %p231 = scmp.eq.s32.totalorder %s27, 1
      %p232 = scmp.ne.s32.totalorder %s227, %s229
      %p233 = scmp.eq.s32.totalorder %s27, 0
      %p234 = por %p232, %p233
      %p235 = scmp.ne.s32.totalorder %s227, %s229
      %p236 = scmp.eq.s32.totalorder %s32, 1
      %p237 = por %p235, %p236
      %p238 = scmp.ne.s32.totalorder %s229, %s230
      %p239 = scmp.eq.s32.totalorder %s32, 0
      %p240 = por %p238, %p239
      %p241 = scmp.ne.s32.totalorder %s229, %s230
      %p242 = scmp.eq.s32.totalorder %s33, 1
      %p243 = por %p241, %p242
      %p245 = scmp.ne.s32.totalorder %s230, %s244
      %p246 = scmp.eq.s32.totalorder %s33, 0
      %p247 = por %p245, %p246
      %s249 = sadd.s32 %s248, 1
      %p252 = scmp.eq.s32.totalorder %s27, 1
      %p253 = scmp.ne.s32.totalorder %s248, %s250
      %p254 = scmp.eq.s32.totalorder %s27, 0
      %p255 = por %p253, %p254
      %p256 = scmp.ne.s32.totalorder %s248, %s250
      %p257 = scmp.eq.s32.totalorder %s32, 1
      %p258 = por %p256, %p257
      %p259 = scmp.ne.s32.totalorder %s250, %s251
      %p260 = scmp.eq.s32.totalorder %s32, 0
      %p261 = por %p259, %p260
      %p262 = scmp.ne.s32.totalorder %s250, %s251
      %p263 = scmp.eq.s32.totalorder %s33, 1
      %p264 = por %p262, %p263
      %p266 = scmp.ne.s32.totalorder %s251, %s265
      %p267 = scmp.eq.s32.totalorder %s33, 0
      %p268 = por %p266, %p267
      %s270 = sadd.s32 %s269, 1
      %p273 = scmp.eq.s32.totalorder %s27, 1
      %p274 = scmp.ne.s32.totalorder %s269, %s271
      %p275 = scmp.eq.s32.totalorder %s27, 0
      %p276 = por %p274, %p275
      %p277 = scmp.ne.s32.totalorder %s269, %s271
      %p278 = scmp.eq.s32.totalorder %s32, 1
      %p279 = por %p277, %p278
      %p280 = scmp.ne.s32.totalorder %s271, %s272
      %p281 = scmp.eq.s32.totalorder %s32, 0
      %p282 = por %p280, %p281
      %p283 = scmp.ne.s32.totalorder %s271, %s272
      %p284 = scmp.eq.s32.totalorder %s33, 1
      %p285 = por %p283, %p284
      %p287 = scmp.ne.s32.totalorder %s272, %s286
      %p288 = scmp.eq.s32.totalorder %s33, 0
      %p289 = por %p287, %p288
      %s290 = ssub.s32 %s34, %s46
      %s291 = ssub.s32 %s35, %s42
      %s292 = sor.u32 %s290, %s291
      %p293 = scmp.eq.s32.totalorder %s292, 0
      %s295 = sadd.s32 %s294, 1
      %s296 = scalar_select %p293, %s294, %s295
      %p299 = pneg %p293
      %p300 = scmp.eq.s32.totalorder %s27, 1
      %p301 = por %p299, %p300
      %p302 = scmp.ne.s32.totalorder %s294, %s297
      %p303 = scmp.eq.s32.totalorder %s27, 0
      %p304 = por %p302, %p303
      %p305 = scmp.ne.s32.totalorder %s294, %s297
      %p306 = scmp.eq.s32.totalorder %s32, 1
      %p307 = por %p305, %p306
      %p308 = scmp.ne.s32.totalorder %s297, %s298
      %p309 = scmp.eq.s32.totalorder %s32, 0
      %p310 = por %p308, %p309
      %p311 = scmp.ne.s32.totalorder %s297, %s298
      %p312 = scmp.eq.s32.totalorder %s33, 1
      %p313 = por %p311, %p312
      %p315 = scmp.ne.s32.totalorder %s298, %s314
      %p316 = scmp.eq.s32.totalorder %s33, 0
      %p317 = por %p315, %p316
      %p318 = scmp.le.s32.totalorder 1, %s27
      %p319 = scmp.lt.s32.totalorder %s27, 3
      %p320 = pnand %p318, %p319
      %p321 = pneg %p320
      // Predicated region
      $region9: #{tpu_custom_call.1} parent=5 // pred_check
        _
      $region10: #{tpu_custom_call.1} parent=5 // pred_check_branch
        %323 = sbr.rel (%p320) target = $region12
      $region11: #{tpu_custom_call.1} parent=5 // pred_region
        %s324 = ssub.s32 %s27, 1
        // Predicated region
        $region13: #{tpu_custom_call.1} parent=11 // pred_check
          %p325 = pneg %p114
        $region14: #{tpu_custom_call.1} parent=11 // pred_check_branch
          %327 = sbr.rel (%p325) target = $region16
        $region15: #{tpu_custom_call.1} parent=11 // pred_region
          %s329 = ssub.s32 1024, 1024
          %330 = vsyncadd [#allocation6], %s329
          %s331 = sshll.u32 [#allocation7], 4
          %s332 = int_to_ptr.vmem [resolvable:$true] %s331
          %337 = dma.hbm_to_vmem [thread:$0]  %s2, 1024, %s332, [#allocation6], 64, 64, 4
        $region16: #{tpu_custom_call.1} parent=11 // pred_fallthru
          _
        // Predicated region
        $region17: #{tpu_custom_call.1} parent=11 // pred_check
          %p338 = pneg %p135
        $region18: #{tpu_custom_call.1} parent=11 // pred_check_branch
          %340 = sbr.rel (%p338) target = $region20
        $region19: #{tpu_custom_call.1} parent=11 // pred_region
          _
        $region20: #{tpu_custom_call.1} parent=11 // pred_fallthru
          _
        // Predicated region
        $region21: #{tpu_custom_call.1} parent=11 // pred_check
          %p341 = pneg %p156
        $region22: #{tpu_custom_call.1} parent=11 // pred_check_branch
          %343 = sbr.rel (%p341) target = $region24
        $region23: #{tpu_custom_call.1} parent=11 // pred_region
          _
        $region24: #{tpu_custom_call.1} parent=11 // pred_fallthru
          _
        // Predicated region
        $region25: #{tpu_custom_call.1} parent=11 // pred_check
          %p344 = pneg %p177
        $region26: #{tpu_custom_call.1} parent=11 // pred_check_branch
          %346 = sbr.rel (%p344) target = $region28
        $region27: #{tpu_custom_call.1} parent=11 // pred_region
          _
        $region28: #{tpu_custom_call.1} parent=11 // pred_fallthru
          _
        // Predicated region
        $region29: #{tpu_custom_call.1} parent=11 // pred_check
          %p347 = pneg %p198
        $region30: #{tpu_custom_call.1} parent=11 // pred_check_branch
          %349 = sbr.rel (%p347) target = $region32
        $region31: #{tpu_custom_call.1} parent=11 // pred_region
          %s351 = ssub.s32 1024, 1024
          %352 = vsyncadd [#allocation9], %s351
          %s353 = sshll.u32 [#allocation8], 4
          %s354 = int_to_ptr.vmem [resolvable:$true] %s353
          %359 = dma.hbm_to_vmem [thread:$0]  %s6, 1024, %s354, [#allocation9], 64, 64, 4
        $region32: #{tpu_custom_call.1} parent=11 // pred_fallthru
          _
        // Predicated region
        $region33: #{tpu_custom_call.1} parent=11 // pred_check
          %p360 = pneg %p219
        $region34: #{tpu_custom_call.1} parent=11 // pred_check_branch
          %362 = sbr.rel (%p360) target = $region36
        $region35: #{tpu_custom_call.1} parent=11 // pred_region
          %s364 = ssub.s32 1024, 1024
          %365 = vsyncadd [#allocation9], %s364
          %s366 = sshll.u32 [#allocation10], 4
          %s367 = int_to_ptr.vmem [resolvable:$true] %s366
          %372 = dma.hbm_to_vmem [thread:$0]  %s7, 1024, %s367, [#allocation9], 64, 64, 4
        $region36: #{tpu_custom_call.1} parent=11 // pred_fallthru
          _
        // Predicated region
        $region37: #{tpu_custom_call.1} parent=11 // pred_check
          %p373 = pneg %p240
        $region38: #{tpu_custom_call.1} parent=11 // pred_check_branch
          %375 = sbr.rel (%p373) target = $region40
        $region39: #{tpu_custom_call.1} parent=11 // pred_region
          _
        $region40: #{tpu_custom_call.1} parent=11 // pred_fallthru
          _
        // Predicated region
        $region41: #{tpu_custom_call.1} parent=11 // pred_check
          %p376 = pneg %p261
        $region42: #{tpu_custom_call.1} parent=11 // pred_check_branch
          %378 = sbr.rel (%p376) target = $region44
        $region43: #{tpu_custom_call.1} parent=11 // pred_region
          _
        $region44: #{tpu_custom_call.1} parent=11 // pred_fallthru
          _
        // Predicated region
        $region45: #{tpu_custom_call.1} parent=11 // pred_check
          %p379 = pneg %p282
        $region46: #{tpu_custom_call.1} parent=11 // pred_check_branch
          %381 = sbr.rel (%p379) target = $region48
        $region47: #{tpu_custom_call.1} parent=11 // pred_region
          _
        $region48: #{tpu_custom_call.1} parent=11 // pred_fallthru
          _
      $region12: #{tpu_custom_call.1} parent=5 // pred_fallthru
        _
      %p382 = scmp.lt.s32.totalorder %s27, 2
      // Predicated region
      $region49: #{tpu_custom_call.1} parent=5 // pred_check
        %p383 = pneg %p382
      $region50: #{tpu_custom_call.1} parent=5 // pred_check_branch
        %385 = sbr.rel (%p383) target = $region52
      $region51: #{tpu_custom_call.1} parent=5 // pred_region
        // Predicated region
        $region53: #{tpu_custom_call.1} parent=51 // pred_check
          %p386 = pneg %p61
        $region54: #{tpu_custom_call.1} parent=51 // pred_check_branch
          %388 = sbr.rel (%p386) target = $region56
        $region55: #{tpu_custom_call.1} parent=51 // pred_region
          %s389 = sand.u32 %s51, 1
          %s390 = scalar_lea.sflag [#allocation3], %s389
          %s391 = sand.u32 %s51, 1
          %s392 = smul.addr %s391, 4
          %s393 = scalar_lea.vmem [#allocation2], %s392
          %s395 = ssub.s32 64, 64
          %396 = vsyncadd %s390, %s395
          %s397 = sadd.s32 %s35, %s34
          %s398 = smul.addr %s397, 64
          %s399 = scalar_lea.hbm %s0, %s398
          %s401 = sshll.u32 %s393, 4
          %s402 = int_to_ptr.vmem [resolvable:$true] %s401
          %404 = dma.hbm_to_vmem [thread:$0]  %s399, 64, %s402, %s390
        $region56: #{tpu_custom_call.1} parent=51 // pred_fallthru
          _
        // Predicated region
        $region57: #{tpu_custom_call.1} parent=51 // pred_check
          %p405 = pneg %p87
        $region58: #{tpu_custom_call.1} parent=51 // pred_check_branch
          %407 = sbr.rel (%p405) target = $region60
        $region59: #{tpu_custom_call.1} parent=51 // pred_region
          %s408 = sand.u32 %s27, 1
          %s409 = scalar_lea.sflag [#allocation6], %s408
          %s410 = sand.u32 %s77, 1
          %s411 = scalar_lea.vmem [#allocation5], %s410
          %s413 = ssub.s32 16, 16
          %414 = vsyncadd %s409, %s413
          %s415 = smul.addr %s34, 16
          %s416 = scalar_lea.hbm %s1, %s415
          %s418 = sshll.u32 %s411, 4
          %s419 = int_to_ptr.vmem [resolvable:$true] %s418
          %421 = dma.hbm_to_vmem [thread:$0]  %s416, 16, %s419, %s409
        $region60: #{tpu_custom_call.1} parent=51 // pred_fallthru
          _
      $region52: #{tpu_custom_call.1} parent=5 // pred_fallthru
        _
      %p422 = scmp.le.s32.totalorder 1, %s27
      %p423 = scmp.lt.s32.totalorder %s27, 3
      %p424 = pnand %p422, %p423
      %p425 = pneg %p424
      // Predicated region
      $region61: #{tpu_custom_call.1} parent=5 // pred_check
        _
      $region62: #{tpu_custom_call.1} parent=5 // pred_check_branch
        %427 = sbr.rel (%p424) target = $region64
      $region63: #{tpu_custom_call.1} parent=5 // pred_region
        %s428 = ssub.s32 %s27, 1
        %s429 = sand.u32 %s54, 1
        %s430 = scalar_lea.sflag [#allocation3], %s429
        %s431 = sand.u32 %s54, 1
        %s432 = smul.addr %s431, 4
        %s433 = scalar_lea.vmem [#allocation2], %s432
        // Predicated region
        $region65: #{tpu_custom_call.1} parent=63 // pred_check
          %p434 = pneg %p67
        $region66: #{tpu_custom_call.1} parent=63 // pred_check_branch
          %436 = sbr.rel (%p434) target = $region68
        $region67: #{tpu_custom_call.1} parent=63 // pred_region
          %437 = dma.done %s430, 64
        $region68: #{tpu_custom_call.1} parent=63 // pred_fallthru
          _
        %s438 = sand.u32 %s32, 1
        %s439 = scalar_lea.sflag [#allocation6], %s438
        %s440 = sand.u32 %s80, 1
        %s441 = scalar_lea.vmem [#allocation5], %s440
        // Predicated region
        $region69: #{tpu_custom_call.1} parent=63 // pred_check
          %p442 = pneg %p93
        $region70: #{tpu_custom_call.1} parent=63 // pred_check_branch
          %444 = sbr.rel (%p442) target = $region72
        $region71: #{tpu_custom_call.1} parent=63 // pred_region
          %445 = dma.done %s439, 16
        $region72: #{tpu_custom_call.1} parent=63 // pred_fallthru
          _
        // Predicated region
        $region73: #{tpu_custom_call.1} parent=63 // pred_check
          %p446 = pneg %p114
        $region74: #{tpu_custom_call.1} parent=63 // pred_check_branch
          %448 = sbr.rel (%p446) target = $region76
        $region75: #{tpu_custom_call.1} parent=63 // pred_region
          %449 = dma.done [#allocation6], 1024
        $region76: #{tpu_custom_call.1} parent=63 // pred_fallthru
          _
        // Predicated region
        $region77: #{tpu_custom_call.1} parent=63 // pred_check
          %p450 = pneg %p198
        $region78: #{tpu_custom_call.1} parent=63 // pred_check_branch
          %452 = sbr.rel (%p450) target = $region80
        $region79: #{tpu_custom_call.1} parent=63 // pred_region
          %453 = dma.done [#allocation9], 1024
        $region80: #{tpu_custom_call.1} parent=63 // pred_fallthru
          _
        // Predicated region
        $region81: #{tpu_custom_call.1} parent=63 // pred_check
          %p454 = pneg %p219
        $region82: #{tpu_custom_call.1} parent=63 // pred_check_branch
          %456 = sbr.rel (%p454) target = $region84
        $region83: #{tpu_custom_call.1} parent=63 // pred_region
          %457 = dma.done [#allocation9], 1024
        $region84: #{tpu_custom_call.1} parent=63 // pred_fallthru
          _
        %s458 = sand.u32 %s54, 1
        %s459 = scalar_lea.sflag [#allocation3], %s458
        %s460 = sand.u32 %s54, 1
        %s461 = smul.addr %s460, 4
        %s462 = scalar_lea.vmem [#allocation2], %s461
        %p463 = pneg %p67
        %p464 = pneg %p64
        %s465 = sand.u32 %s32, 1
        %s466 = scalar_lea.sflag [#allocation6], %s465
        %s467 = sand.u32 %s80, 1
        %s468 = scalar_lea.vmem [#allocation5], %s467
        %p469 = pneg %p93
        %p470 = pneg %p90
        %p471 = pneg %p114
        %p472 = pneg %p111
        %p473 = pneg %p135
        %p474 = pneg %p132
        %p475 = pneg %p156
        %p476 = pneg %p153
        %p477 = pneg %p177
        %p478 = pneg %p174
        %p479 = pneg %p198
        %p480 = pneg %p195
        %p481 = pneg %p219
        %p482 = pneg %p216
        %p483 = pneg %p240
        %p484 = pneg %p237
        %p485 = pneg %p261
        %p486 = pneg %p258
        %p487 = pneg %p282
        %p488 = pneg %p279
        %p489 = pneg %p310
        %p490 = pneg %p307
        %s491 = sand.u32 %s297, 1
        %s492 = scalar_lea.sflag [#allocation4], %s491
        %s493 = sand.u32 %s297, 1
        %s494 = smul.addr %s493, 4
        %s495 = scalar_lea.vmem [#allocation11], %s494
        %v497 = vlaneseq
        %v498 = vand.u32 %v497, 127
        %vm499 = vcmp.lt.s32.totalorder %v498, 32
        %v500 = vsel %vm499, 1, 0
        %v501 = vcvt.s32.f32 %v500
        %v502 = vld [vmem:[%s433] sm:$0xf]
        %v503 = vld [vmem:[#allocation7] sm:$0xf]
        %v504 = vld [vmem:[#allocation7 + $0x4] sm:$0xf]
        %v505 = vld [vmem:[#allocation7 + $0x8] sm:$0xf]
        %v506 = vld [vmem:[#allocation7 + $0xc] sm:$0xf]
        %v507 = vld [vmem:[#allocation7 + $0x10] sm:$0xf]
        %v508 = vld [vmem:[#allocation7 + $0x14] sm:$0xf]
        %v509 = vld [vmem:[#allocation7 + $0x18] sm:$0xf]
        %v510 = vld [vmem:[#allocation7 + $0x1c] sm:$0xf]
        %v511 = vld [vmem:[#allocation7 + $0x20] sm:$0xf]
        %v512 = vld [vmem:[#allocation7 + $0x24] sm:$0xf]
        %v513 = vld [vmem:[#allocation7 + $0x28] sm:$0xf]
        %v514 = vld [vmem:[#allocation7 + $0x2c] sm:$0xf]
        %v515 = vld [vmem:[#allocation7 + $0x30] sm:$0xf]
        %v516 = vld [vmem:[#allocation7 + $0x34] sm:$0xf]
        %v517 = vld [vmem:[#allocation7 + $0x38] sm:$0xf]
        %v518 = vld [vmem:[#allocation7 + $0x3c] sm:$0xf]
        %v519 = vld [vmem:[%s3] sm:$0x1]
        %v521 = vlaneseq
        %v522 = vshrl.u32 %v521, 7
        %v523 = vsub.s32 0, %v522
        %v524 = vrot.slane %v519, %v523
        %v542 = vunpack.c.l.b16 %v503
        %v543 = vunpack.c.l.b16 %v504
        %v544 = vunpack.c.l.b16 %v505
        %v545 = vunpack.c.l.b16 %v506
        %v546 = vunpack.c.l.b16 %v507
        %v547 = vunpack.c.l.b16 %v508
        %v548 = vunpack.c.l.b16 %v509
        %v549 = vunpack.c.l.b16 %v510
        %v550 = vunpack.c.l.b16 %v511
        %v551 = vunpack.c.l.b16 %v512
        %v552 = vunpack.c.l.b16 %v513
        %v553 = vunpack.c.l.b16 %v514
        %v554 = vunpack.c.l.b16 %v515
        %v555 = vunpack.c.l.b16 %v516
        %v556 = vunpack.c.l.b16 %v517
        %v557 = vunpack.c.l.b16 %v518
        %v558 = vpack.c.b16 %v543, %v542
        %v559 = vpack.c.b16 %v545, %v544
        %v560 = vpack.c.b16 %v547, %v546
        %v561 = vpack.c.b16 %v549, %v548
        %v562 = vpack.c.b16 %v551, %v550
        %v563 = vpack.c.b16 %v553, %v552
        %v564 = vpack.c.b16 %v555, %v554
        %v565 = vpack.c.b16 %v557, %v556
        %574 = vmatprep.subr.bf16.mxu0 0
        %575 = vmatpush1.bf16.msra.mxu0 %v565
        %576 = vmatprep.subr.bf16.mxu0 0
        %577 = vmatpush1.bf16.msra.mxu0 %v564
        %578 = vmatprep.subr.bf16.mxu0 0
        %579 = vmatpush1.bf16.msra.mxu0 %v563
        %580 = vmatprep.subr.bf16.mxu0 0
        %581 = vmatpush1.bf16.msra.mxu0 %v562
        %582 = vmatprep.subr.bf16.mxu0 0
        %583 = vmatpush1.bf16.msra.mxu0 %v561
        %584 = vmatprep.subr.bf16.mxu0 0
        %585 = vmatpush1.bf16.msra.mxu0 %v560
        %586 = vmatprep.subr.bf16.mxu0 0
        %587 = vmatpush1.bf16.msra.mxu0 %v559
        %588 = vmatprep.subr.bf16.mxu0 0
        %589 = vmatpush1.bf16.msra.mxu0 %v558
        %590 = vmatprep.subr.bf16.mxu0 0
        %591 = vmatpush2.bf16.msra.mxu0 0
        %592 = vmatprep.subr.bf16.mxu0 0
        %593 = vmatpush2.bf16.msra.mxu0 0
        %594 = vmatprep.subr.bf16.mxu0 0
        %595 = vmatpush2.bf16.msra.mxu0 0
        %596 = vmatprep.subr.bf16.mxu0 0
        %597 = vmatpush2.bf16.msra.mxu0 0
        %598 = vmatprep.subr.bf16.mxu0 0
        %599 = vmatpush2.bf16.msra.mxu0 0
        %600 = vmatprep.subr.bf16.mxu0 0
        %601 = vmatpush2.bf16.msra.mxu0 0
        %602 = vmatprep.subr.bf16.mxu0 0
        %603 = vmatpush2.bf16.msra.mxu0 0
        %604 = vmatprep.subr.bf16.mxu0 0
        %605 = vmatpush2.bf16.msra.mxu0 0
        %606 = vmatprep.mubr.bf16.mxu0 0
        %607 = vmatmul.mubr.bf16.gmra.mxu0 %v502
        %v608 = vpop.f32.mrf.mxu0
        %v609 = vadd.f32 %v524, %v608
        %v610 = vpop.f32.mrf.mxu0
        %v611 = vpop.f32.mrf.mxu0
        %v612 = vpop.f32.mrf.mxu0
        %613 = vdwg.mxu0
        %v614 = vld [vmem:[%s4] sm:$0x1]
        %v615 = vld [vmem:[%s5] sm:$0x1]
        %616 = vadd.xlane.f32.xlu0 %v609
        %v617 = vpop.xlane.xlu0 %616
        %v618 = vmul.f32 %v617, 0.03125
        %v619 = vsub.f32 %v609, %v618
        %v620 = vmul.f32 %v619, %v501
        %v621 = vmul.f32 %v620, %v620
        %622 = vadd.xlane.f32.xlu0 %v621
        %v623 = vpop.xlane.xlu0 %622
        %v624 = vmul.f32 %v623, 0.03125
        %v625 = vadd.f32 %v624, 1e-05
        %v626 = vrsqrt.pop %v625
        %v627 = vmul.f32 %v619, %v626
        %v629 = vlaneseq
        %v630 = vshrl.u32 %v629, 7
        %v631 = vsub.s32 0, %v630
        %v632 = vrot.slane %v614, %v631
        %v634 = vmul.f32 %v627, %v632
        %v636 = vlaneseq
        %v637 = vshrl.u32 %v636, 7
        %v638 = vsub.s32 0, %v637
        %v639 = vrot.slane %v615, %v638
        %v641 = vadd.f32 %v634, %v639
        %v642 = vpack.c.bf16 %v609, %v609
        %643 = vst [vmem:[%s495] sm:$0xf] %v642
        %v644 = vpack.c.bf16 %v641, %v641
        %v645 = vld [vmem:[#allocation8] sm:$0xf]
        %v646 = vld [vmem:[#allocation8 + $0x4] sm:$0xf]
        %v647 = vld [vmem:[#allocation8 + $0x8] sm:$0xf]
        %v648 = vld [vmem:[#allocation8 + $0xc] sm:$0xf]
        %v649 = vld [vmem:[#allocation8 + $0x10] sm:$0xf]
        %v650 = vld [vmem:[#allocation8 + $0x14] sm:$0xf]
        %v651 = vld [vmem:[#allocation8 + $0x18] sm:$0xf]
        %v652 = vld [vmem:[#allocation8 + $0x1c] sm:$0xf]
        %v653 = vld [vmem:[#allocation8 + $0x20] sm:$0xf]
        %v654 = vld [vmem:[#allocation8 + $0x24] sm:$0xf]
        %v655 = vld [vmem:[#allocation8 + $0x28] sm:$0xf]
        %v656 = vld [vmem:[#allocation8 + $0x2c] sm:$0xf]
        %v657 = vld [vmem:[#allocation8 + $0x30] sm:$0xf]
        %v658 = vld [vmem:[#allocation8 + $0x34] sm:$0xf]
        %v659 = vld [vmem:[#allocation8 + $0x38] sm:$0xf]
        %v660 = vld [vmem:[#allocation8 + $0x3c] sm:$0xf]
        %v661 = vld [vmem:[%s441] sm:$0x1]
        %v663 = vlaneseq
        %v664 = vshrl.u32 %v663, 7
        %v665 = vsub.s32 0, %v664
        %v666 = vrot.slane %v661, %v665
        %v684 = vunpack.c.l.b16 %v645
        %v685 = vunpack.c.l.b16 %v646
        %v686 = vunpack.c.l.b16 %v647
        %v687 = vunpack.c.l.b16 %v648
        %v688 = vunpack.c.l.b16 %v649
        %v689 = vunpack.c.l.b16 %v650
        %v690 = vunpack.c.l.b16 %v651
        %v691 = vunpack.c.l.b16 %v652
        %v692 = vunpack.c.l.b16 %v653
        %v693 = vunpack.c.l.b16 %v654
        %v694 = vunpack.c.l.b16 %v655
        %v695 = vunpack.c.l.b16 %v656
        %v696 = vunpack.c.l.b16 %v657
        %v697 = vunpack.c.l.b16 %v658
        %v698 = vunpack.c.l.b16 %v659
        %v699 = vunpack.c.l.b16 %v660
        %v700 = vpack.c.b16 %v685, %v684
        %v701 = vpack.c.b16 %v687, %v686
        %v702 = vpack.c.b16 %v689, %v688
        %v703 = vpack.c.b16 %v691, %v690
        %v704 = vpack.c.b16 %v693, %v692
        %v705 = vpack.c.b16 %v695, %v694
        %v706 = vpack.c.b16 %v697, %v696
        %v707 = vpack.c.b16 %v699, %v698
        %716 = vmatprep.subr.bf16.mxu0 0
        %717 = vmatpush1.bf16.msra.mxu0 %v707
        %718 = vmatprep.subr.bf16.mxu0 0
        %719 = vmatpush1.bf16.msra.mxu0 %v706
        %720 = vmatprep.subr.bf16.mxu0 0
        %721 = vmatpush1.bf16.msra.mxu0 %v705
        %722 = vmatprep.subr.bf16.mxu0 0
        %723 = vmatpush1.bf16.msra.mxu0 %v704
        %724 = vmatprep.subr.bf16.mxu0 0
        %725 = vmatpush1.bf16.msra.mxu0 %v703
        %726 = vmatprep.subr.bf16.mxu0 0
        %727 = vmatpush1.bf16.msra.mxu0 %v702
        %728 = vmatprep.subr.bf16.mxu0 0
        %729 = vmatpush1.bf16.msra.mxu0 %v701
        %730 = vmatprep.subr.bf16.mxu0 0
        %731 = vmatpush1.bf16.msra.mxu0 %v700
        %732 = vmatprep.subr.bf16.mxu0 0
        %733 = vmatpush2.bf16.msra.mxu0 0
        %734 = vmatprep.subr.bf16.mxu0 0
        %735 = vmatpush2.bf16.msra.mxu0 0
        %736 = vmatprep.subr.bf16.mxu0 0
        %737 = vmatpush2.bf16.msra.mxu0 0
        %738 = vmatprep.subr.bf16.mxu0 0
        %739 = vmatpush2.bf16.msra.mxu0 0
        %740 = vmatprep.subr.bf16.mxu0 0
        %741 = vmatpush2.bf16.msra.mxu0 0
        %742 = vmatprep.subr.bf16.mxu0 0
        %743 = vmatpush2.bf16.msra.mxu0 0
        %744 = vmatprep.subr.bf16.mxu0 0
        %745 = vmatpush2.bf16.msra.mxu0 0
        %746 = vmatprep.subr.bf16.mxu0 0
        %747 = vmatpush2.bf16.msra.mxu0 0
        %748 = vmatprep.mubr.bf16.mxu0 0
        %749 = vmatmul.mubr.bf16.gmra.mxu0 %v644
        %v750 = vpop.f32.mrf.mxu0
        %v751 = vadd.f32 %v666, %v750
        %v752 = vpop.f32.mrf.mxu0
        %v753 = vpop.f32.mrf.mxu0
        %v754 = vpop.f32.mrf.mxu0
        %755 = vdwg.mxu0
        %v756 = vxor.u32 %v751, 2147483648
        %v757 = vmul.f32 %v756, 1.442695
        %v758 = vpow.pop %v757
        %v759 = vadd.f32 %v758, 1.0
        %v760 = vrcp.pop %v759
        %v761 = vmul.f32 1.0, %v760
        %v762 = vmul.f32 %v751, %v761
        %v763 = vpack.c.bf16 %v762, %v762
        %v764 = vld [vmem:[#allocation10] sm:$0xf]
        %v765 = vld [vmem:[#allocation10 + $0x4] sm:$0xf]
        %v766 = vld [vmem:[#allocation10 + $0x8] sm:$0xf]
        %v767 = vld [vmem:[#allocation10 + $0xc] sm:$0xf]
        %v768 = vld [vmem:[#allocation10 + $0x10] sm:$0xf]
        %v769 = vld [vmem:[#allocation10 + $0x14] sm:$0xf]
        %v770 = vld [vmem:[#allocation10 + $0x18] sm:$0xf]
        %v771 = vld [vmem:[#allocation10 + $0x1c] sm:$0xf]
        %v772 = vld [vmem:[#allocation10 + $0x20] sm:$0xf]
        %v773 = vld [vmem:[#allocation10 + $0x24] sm:$0xf]
        %v774 = vld [vmem:[#allocation10 + $0x28] sm:$0xf]
        %v775 = vld [vmem:[#allocation10 + $0x2c] sm:$0xf]
        %v776 = vld [vmem:[#allocation10 + $0x30] sm:$0xf]
        %v777 = vld [vmem:[#allocation10 + $0x34] sm:$0xf]
        %v778 = vld [vmem:[#allocation10 + $0x38] sm:$0xf]
        %v779 = vld [vmem:[#allocation10 + $0x3c] sm:$0xf]
        %v780 = vld [vmem:[%s8] sm:$0x1]
        %v782 = vlaneseq
        %v783 = vshrl.u32 %v782, 7
        %v784 = vsub.s32 0, %v783
        %v785 = vrot.slane %v780, %v784
        %v803 = vunpack.c.l.b16 %v764
        %v804 = vunpack.c.l.b16 %v765
        %v805 = vunpack.c.l.b16 %v766
        %v806 = vunpack.c.l.b16 %v767
        %v807 = vunpack.c.l.b16 %v768
        %v808 = vunpack.c.l.b16 %v769
        %v809 = vunpack.c.l.b16 %v770
        %v810 = vunpack.c.l.b16 %v771
        %v811 = vunpack.c.l.b16 %v772
        %v812 = vunpack.c.l.b16 %v773
        %v813 = vunpack.c.l.b16 %v774
        %v814 = vunpack.c.l.b16 %v775
        %v815 = vunpack.c.l.b16 %v776
        %v816 = vunpack.c.l.b16 %v777
        %v817 = vunpack.c.l.b16 %v778
        %v818 = vunpack.c.l.b16 %v779
        %v819 = vpack.c.b16 %v804, %v803
        %v820 = vpack.c.b16 %v806, %v805
        %v821 = vpack.c.b16 %v808, %v807
        %v822 = vpack.c.b16 %v810, %v809
        %v823 = vpack.c.b16 %v812, %v811
        %v824 = vpack.c.b16 %v814, %v813
        %v825 = vpack.c.b16 %v816, %v815
        %v826 = vpack.c.b16 %v818, %v817
        %835 = vmatprep.subr.bf16.mxu0 0
        %836 = vmatpush1.bf16.msra.mxu0 %v826
        %837 = vmatprep.subr.bf16.mxu0 0
        %838 = vmatpush1.bf16.msra.mxu0 %v825
        %839 = vmatprep.subr.bf16.mxu0 0
        %840 = vmatpush1.bf16.msra.mxu0 %v824
        %841 = vmatprep.subr.bf16.mxu0 0
        %842 = vmatpush1.bf16.msra.mxu0 %v823
        %843 = vmatprep.subr.bf16.mxu0 0
        %844 = vmatpush1.bf16.msra.mxu0 %v822
        %845 = vmatprep.subr.bf16.mxu0 0
        %846 = vmatpush1.bf16.msra.mxu0 %v821
        %847 = vmatprep.subr.bf16.mxu0 0
        %848 = vmatpush1.bf16.msra.mxu0 %v820
        %849 = vmatprep.subr.bf16.mxu0 0
        %850 = vmatpush1.bf16.msra.mxu0 %v819
        %851 = vmatprep.subr.bf16.mxu0 0
        %852 = vmatpush2.bf16.msra.mxu0 0
        %853 = vmatprep.subr.bf16.mxu0 0
        %854 = vmatpush2.bf16.msra.mxu0 0
        %855 = vmatprep.subr.bf16.mxu0 0
        %856 = vmatpush2.bf16.msra.mxu0 0
        %857 = vmatprep.subr.bf16.mxu0 0
        %858 = vmatpush2.bf16.msra.mxu0 0
        %859 = vmatprep.subr.bf16.mxu0 0
        %860 = vmatpush2.bf16.msra.mxu0 0
        %861 = vmatprep.subr.bf16.mxu0 0
        %862 = vmatpush2.bf16.msra.mxu0 0
        %863 = vmatprep.subr.bf16.mxu0 0
        %864 = vmatpush2.bf16.msra.mxu0 0
        %865 = vmatprep.subr.bf16.mxu0 0
        %866 = vmatpush2.bf16.msra.mxu0 0
        %867 = vmatprep.mubr.bf16.mxu0 0
        %868 = vmatmul.mubr.bf16.gmra.mxu0 %v763
        %v869 = vpop.f32.mrf.mxu0
        %v870 = vadd.f32 %v785, %v869
        %v871 = vpop.f32.mrf.mxu0
        %v872 = vpop.f32.mrf.mxu0
        %v873 = vpop.f32.mrf.mxu0
        %874 = vdwg.mxu0
        %v875 = vld [vmem:[%s9] sm:$0x1]
        %v876 = vld [vmem:[%s10] sm:$0x1]
        %877 = vadd.xlane.f32.xlu0 %v870
        %v878 = vpop.xlane.xlu0 %877
        %v879 = vmul.f32 %v878, 0.03125
        %v880 = vsub.f32 %v870, %v879
        %v881 = vmul.f32 %v880, %v501
        %v882 = vmul.f32 %v881, %v881
        %883 = vadd.xlane.f32.xlu0 %v882
        %v884 = vpop.xlane.xlu0 %883
        %v885 = vmul.f32 %v884, 0.03125
        %v886 = vadd.f32 %v885, 1e-05
        %v887 = vrsqrt.pop %v886
        %v888 = vmul.f32 %v880, %v887
        %v890 = vlaneseq
        %v891 = vshrl.u32 %v890, 7
        %v892 = vsub.s32 0, %v891
        %v893 = vrot.slane %v875, %v892
        %v895 = vmul.f32 %v888, %v893
        %v897 = vlaneseq
        %v898 = vshrl.u32 %v897, 7
        %v899 = vsub.s32 0, %v898
        %v900 = vrot.slane %v876, %v899
        %v902 = vadd.f32 %v895, %v900
        %v903 = vld [vmem:[%s495] sm:$0xf]
        %v904 = vunpack.c.l.bf16 %v903
        %v905 = vadd.f32 %v904, %v902
        %v906 = vpack.c.bf16 %v905, %v905
        %907 = vst [vmem:[%s495] sm:$0xf] %v906
        %s908 = sand.u32 %s297, 1
        %s909 = scalar_lea.sflag [#allocation4], %s908
        %s910 = sand.u32 %s297, 1
        %s911 = smul.addr %s910, 4
        %s912 = scalar_lea.vmem [#allocation11], %s911
        // Predicated region
        $region85: #{tpu_custom_call.1} parent=63 // pred_check
          %p913 = pneg %p307
        $region86: #{tpu_custom_call.1} parent=63 // pred_check_branch
          %915 = sbr.rel (%p913) target = $region88
        $region87: #{tpu_custom_call.1} parent=63 // pred_region
          %s917 = ssub.s32 64, 64
          %918 = vsyncadd %s909, %s917
          %s919 = sadd.s32 %s37, %s36
          %s920 = smul.addr %s919, 64
          %s921 = scalar_lea.hbm %s11, %s920
          %s923 = sshll.u32 %s912, 4
          %s924 = int_to_ptr.vmem [resolvable:$true] %s923
          %926 = dma.vmem_to_hbm [thread:$0]  %s924, 64, %s921, %s909
        $region88: #{tpu_custom_call.1} parent=63 // pred_fallthru
          _
      $region64: #{tpu_custom_call.1} parent=5 // pred_fallthru
        _
      %p927 = scmp.le.s32.totalorder 2, %s27
      // Predicated region
      $region89: #{tpu_custom_call.1} parent=5 // pred_check
        %p928 = pneg %p927
      $region90: #{tpu_custom_call.1} parent=5 // pred_check_branch
        %930 = sbr.rel (%p928) target = $region92
      $region91: #{tpu_custom_call.1} parent=5 // pred_region
        %s931 = ssub.s32 %s27, 2
        // Predicated region
        $region93: #{tpu_custom_call.1} parent=91 // pred_check
          %p932 = pneg %p313
        $region94: #{tpu_custom_call.1} parent=91 // pred_check_branch
          %934 = sbr.rel (%p932) target = $region96
        $region95: #{tpu_custom_call.1} parent=91 // pred_region
          %s935 = sand.u32 %s298, 1
          %s936 = scalar_lea.sflag [#allocation4], %s935
          %s937 = sand.u32 %s298, 1
          %s938 = smul.addr %s937, 4
          %s939 = scalar_lea.vmem [#allocation11], %s938
          %940 = dma.done %s936, 64
        $region96: #{tpu_custom_call.1} parent=91 // pred_fallthru
          _
      $region92: #{tpu_custom_call.1} parent=5 // pred_fallthru
        _
    $region6: #{tpu_custom_call.1} parent=1 // loop_footer
      %s31 = sadd.s32 1, %s27
    $region7: #{tpu_custom_call.1} parent=1 // loop_footer_branch
      %26 = sbr.rel target = $region3
    $region8: #{tpu_custom_call.1} parent=1 // loop_exit
      _
    %941 = vsyncpa [#allocation3], 1
    %s942 = scalar_lea.sflag [#allocation3], 1
    %943 = vsyncpa %s942, 1
    %944 = vsyncpa [#allocation6], 1
    %s945 = scalar_lea.sflag [#allocation6], 1
    %946 = vsyncpa %s945, 1
    %947 = vsyncpa [#allocation9], 1
    %948 = vsyncpa [#allocation4], 1
    %s949 = scalar_lea.sflag [#allocation4], 1
    %950 = vsyncpa %s949, 1

</llo_original>
